<compile_context>
chip_gen: v6e
topology: v6e:2x2x1
jax: 0.10.0
libtpu: 0.0.40
codegen_flags: <defaults>
</compile_context>

<pallas_src>
import functools

import jax
import jax.numpy as jnp
import numpy as np
from jax.experimental import pallas as pl
from jax.experimental.pallas import tpu as pltpu


# ---------------------------------------------------------------------------
# per-generation budgets
# ---------------------------------------------------------------------------
_GEN_CONFIG = {
    # per_buffer_bytes : target bytes per (single) input tile (double-buffered)
    # vmem_cap_bytes   : ceiling we will ever request via vmem_limit_bytes
    # acc_budget_bytes : ceiling for the (8, tile_h) f32 accumulator
    # min_feature_tiles: force >= this many feature tiles (megacore sharding)
    "v7x": dict(per_buffer_bytes=12 << 20, vmem_cap_bytes=48 << 20,
                acc_budget_bytes=4 << 20, min_feature_tiles=2),
    "v6e": dict(per_buffer_bytes=16 << 20, vmem_cap_bytes=96 << 20,
                acc_budget_bytes=8 << 20, min_feature_tiles=1),
    "v5e": dict(per_buffer_bytes=8 << 20, vmem_cap_bytes=64 << 20,
                acc_budget_bytes=4 << 20, min_feature_tiles=1),
    "default": dict(per_buffer_bytes=8 << 20, vmem_cap_bytes=48 << 20,
                    acc_budget_bytes=4 << 20, min_feature_tiles=1),
}


def _tpu_generation():
    try:
        kind = jax.devices()[0].device_kind.lower()
    except Exception:
        return "default"
    for tag, gen in (("v7", "v7x"), ("v6", "v6e"), ("v5", "v5e")):
        if tag in kind:
            return gen
    return "default"


# ---------------------------------------------------------------------------
# shared KL epilogue (matches the numpy reference's inf->0 masking order)
# ---------------------------------------------------------------------------
def _kl_from_hat(kl_hat, kl_param):
    """kl_hat: (1, tile_h) f32 mean(|x|) per feature -> scalar sum of kl terms."""
    p = jnp.float32(kl_param)
    one = jnp.float32(1.0)

    t1 = p / kl_hat
    t1 = jnp.where(jnp.isinf(t1), jnp.float32(0.0), t1)

    t2 = (one - p) / (one - kl_hat)
    t2 = jnp.where(jnp.isinf(t2), jnp.float32(0.0), t2)

    kl = p * jnp.log(t1) + (one - p) * jnp.log(t2)
    kl = jnp.where(jnp.isinf(kl), jnp.float32(0.0), kl)
    return jnp.sum(kl)


# ---------------------------------------------------------------------------
# kernels
# ---------------------------------------------------------------------------
def _kl_single_kernel(x_ref, o_ref, *, kl_param):
    """Single grid step: whole (B, H) tile resident in VMEM."""
    x = x_ref[...].astype(jnp.float32)
    kl_hat = jnp.mean(jnp.abs(x), axis=0, keepdims=True)  # (1, H)
    o_ref[0] = _kl_from_hat(kl_hat, kl_param)


def _kl_tiled_kernel(x_ref, o_ref, acc_ref, *, kl_param, batch_size, abs_first):
    """grid = (H//tile_h [parallel], B//tile_b [arbitrary, innermost]).

    acc_ref is an (8, tile_h) f32 accumulator: the hot loop only does VPU adds
    (tile reshaped to (tile_b//8, 8, tile_h) and summed over the leading axis).
    The 8-sublane reduce + KL math runs once per feature tile, on the last
    batch step, writing a per-feature-tile partial to its own SMEM slot.
    """
    b = pl.program_id(1)

    @pl.when(b == 0)
    def _():
        acc_ref[...] = jnp.zeros_like(acc_ref)

    x = x_ref[...]                                        # (tile_b, tile_h)
    if abs_first:
        # narrow dtype on v6e/v7x: abs on native dtype (sign-bit clear), then cast
        ax = jnp.abs(x).astype(jnp.float32)
    else:
        ax = jnp.abs(x.astype(jnp.float32))
    tb, th = ax.shape
    acc_ref[...] += jnp.sum(ax.reshape(tb // 8, 8, th), axis=0)

    @pl.when(b == pl.num_programs(1) - 1)
    def _():
        kl_hat = jnp.sum(acc_ref[...], axis=0, keepdims=True) / jnp.float32(batch_size)
        o_ref[0] = _kl_from_hat(kl_hat, kl_param)


# ---------------------------------------------------------------------------
# helpers
# ---------------------------------------------------------------------------
def _round_up(x, m):
    return ((x + m - 1) // m) * m


def _largest_divisor_multiple(total, base, cap):
    """Largest multiple of `base` that divides `total` and is <= cap (min base)."""
    best = base
    cap = max(base, min(total, cap))
    d = base
    while d <= cap:
        if total % d == 0:
            best = d
        d += base
    return best


# ---------------------------------------------------------------------------
# wrapper
# ---------------------------------------------------------------------------
def kl_divergence(data, kl_param, kl_coeff, *,
                  tile_b=None, tile_h=None,
                  force_tiled=False,
                  fastpath_bytes=4 * 1024 * 1024,
                  per_buffer_bytes=None):
    """Pallas equivalent of KLDivergence(kl_param, kl_coeff).forward(data)."""
    B, H = data.shape
    itemsize = jnp.dtype(data.dtype).itemsize
    total_bytes = B * H * itemsize

    gen = _tpu_generation()
    cfg = _GEN_CONFIG.get(gen, _GEN_CONFIG["default"])
    if per_buffer_bytes is None:
        per_buffer_bytes = cfg["per_buffer_bytes"]

    # ----- fast path: whole array in one step (small inputs only) -----
    use_fast = (not force_tiled) and (total_bytes <= fastpath_bytes)
    if use_fast:
        kernel = functools.partial(_kl_single_kernel, kl_param=float(kl_param))
        out = pl.pallas_call(
            kernel,
            out_shape=jax.ShapeDtypeStruct((1,), jnp.float32),
            grid_spec=pltpu.PrefetchScalarGridSpec(
                num_scalar_prefetch=0,
                grid=(1,),
                in_specs=[pl.BlockSpec((B, H), lambda i: (0, 0))],
                out_specs=pl.BlockSpec((1,), lambda i: (0,),
                                       memory_space=pltpu.SMEM),
            ),
            compiler_params=pltpu.CompilerParams(
                dimension_semantics=("arbitrary",)),
        )(data)
        return jnp.float32(kl_coeff) * out[0]

    # ----- tiled path -----
    # dtype-aware sublane alignment: f32 -> 8, bf16/f16 -> 16, int8/fp8 -> 32
    sub_align = {1: 32, 2: 16}.get(itemsize, 8)
    abs_first = (itemsize < 4) and gen in ("v6e", "v7x")

    # Zero-padding is numerically neutral here: padded rows contribute 0 to the
    # |x| sum (we divide by the true B), padded feature columns give kl_hat=0
    # whose KL term is zeroed by the inf->0 masking (same as a dead feature).
    if tile_h is not None:
        assert tile_h % 128 == 0, tile_h
        H_pad = _round_up(H, tile_h)
    else:
        H_pad = _round_up(H, 128)
    if tile_b is not None:
        assert tile_b % 8 == 0, tile_b
        B_pad = _round_up(B, tile_b)
    else:
        B_pad = _round_up(B, sub_align)

    if (B_pad, H_pad) != (B, H):
        data = jnp.pad(data, ((0, B_pad - B), (0, H_pad - H)))

    if tile_h is None:
        # Prefer full feature width (lane-dense rows, widest DMA bursts); only
        # shrink if the f32 accumulator would blow its budget, then split for
        # v7x megacore so both TensorCores get feature tiles.
        tile_h = H_pad
        if 8 * tile_h * 4 > cfg["acc_budget_bytes"]:
            tile_h = _largest_divisor_multiple(H_pad, 128,
                                               cfg["acc_budget_bytes"] // 32)
        mft = cfg["min_feature_tiles"]
        if mft > 1 and H_pad // tile_h < mft and H_pad >= mft * 128:
            tile_h = _largest_divisor_multiple(H_pad, 128, H_pad // mft)

    if tile_b is None:
        tile_b_cap = max(sub_align, per_buffer_bytes // (tile_h * itemsize))
        tile_b = _largest_divisor_multiple(B_pad, sub_align, tile_b_cap)

    assert B_pad % tile_b == 0 and tile_b % 8 == 0, (B_pad, tile_b)
    assert H_pad % tile_h == 0 and tile_h % 128 == 0, (H_pad, tile_h)

    num_h = H_pad // tile_h
    num_b = B_pad // tile_b

    # vmem_limit derived from the actual footprint: double-buffered input tile,
    # f32 accumulator, ~2 MiB headroom for compiler scratch; capped per chip.
    vmem_need = (2 * tile_b * tile_h * itemsize
                 + 8 * tile_h * 4
                 + (2 << 20))
    vmem_limit = int(min(vmem_need, cfg["vmem_cap_bytes"]))

    kernel = functools.partial(
        _kl_tiled_kernel,
        kl_param=float(kl_param),
        batch_size=float(B),          # true batch, not padded
        abs_first=abs_first,
    )

    partials = pl.pallas_call(
        kernel,
        out_shape=jax.ShapeDtypeStruct((num_h,), jnp.float32),
        grid_spec=pltpu.PrefetchScalarGridSpec(
            num_scalar_prefetch=0,
            # feature axis first (parallel -> megacore / 2 TCs on v7x),
            # batch reduction axis last (arbitrary, innermost).
            grid=(num_h, num_b),
            in_specs=[pl.BlockSpec((tile_b, tile_h), lambda h, b: (b, h))],
            out_specs=pl.BlockSpec((1,), lambda h, b: (h,),
                                   memory_space=pltpu.SMEM),
            scratch_shapes=[pltpu.VMEM((8, tile_h), jnp.float32)],
        ),
        compiler_params=pltpu.CompilerParams(
            dimension_semantics=("parallel", "arbitrary"),
            vmem_limit_bytes=vmem_limit,
        ),
    )(data)

    return jnp.float32(kl_coeff) * jnp.sum(partials)


# ---------------------------------------------------------------------------
# numpy reference replicating the torch/numpy module semantics
# ---------------------------------------------------------------------------
def kl_divergence_ref(data, kl_param, kl_coeff):
    data = np.asarray(data, dtype=np.float32)
    kl_hat = np.mean(np.abs(data), axis=0)
    with np.errstate(divide="ignore", invalid="ignore"):
        t1 = kl_param / kl_hat
        t1[np.isinf(t1)] = 0
        t2 = (1 - kl_param) / (1 - kl_hat)
        t2[np.isinf(t2)] = 0
        kl = kl_param * np.log(t1) + (1 - kl_param) * np.log(t2)
        kl[np.isinf(kl)] = 0
        return np.float32(kl_coeff * np.sum(kl))


if __name__ == "__main__":
    # NOTE: kl_param must not be exactly 0.0 or 1.0 (0*log(0) -> NaN), same
    # precondition as the torch/numpy module.
    kl_param = 0.05   # "module params" — deterministic, set in-script
    kl_coeff = 0.1

    key = jax.random.PRNGKey(0)
    k1, k2, k3, k4 = jax.random.split(key, 4)

    def check(name, out, ref):
        if not np.allclose(np.asarray(out), ref, rtol=2e-3, atol=2e-3):
            raise AssertionError(f"{name} mismatch: pallas={float(out)} ref={float(ref)}")

    # 1) small shape -> single-tile fast path (dead feature exercises inf->0 mask)
    B1, H1 = 16, 128
    d1 = jax.random.uniform(k1, (B1, H1), dtype=jnp.float32, minval=0.0, maxval=0.8)
    d1 = d1.at[:, 7].set(0.0)
    out1 = jax.block_until_ready(kl_divergence(d1, kl_param, kl_coeff))
    check("fast-path", out1, kl_divergence_ref(np.asarray(d1), kl_param, kl_coeff))

    # 2) force the tiled (grid) path with small tiles to exercise accumulation
    #    across batch tiles and multiple feature-tile partials.
    B2, H2 = 64, 256
    d2 = jax.random.uniform(k2, (B2, H2), dtype=jnp.float32, minval=0.0, maxval=0.8)
    d2 = d2.at[:, 33].set(0.0)
    out2 = jax.block_until_ready(
        kl_divergence(d2, kl_param, kl_coeff, force_tiled=True, tile_b=16, tile_h=128))
    check("tiled-path", out2, kl_divergence_ref(np.asarray(d2), kl_param, kl_coeff))

    # 3) unaligned shape -> zero-padded tiled path (no single-block fallback)
    B3, H3 = 20, 160
    d3 = jax.random.uniform(k3, (B3, H3), dtype=jnp.float32, minval=0.0, maxval=0.8)
    out3 = jax.block_until_ready(
        kl_divergence(d3, kl_param, kl_coeff, force_tiled=True, tile_b=8, tile_h=128))
    check("padded-tiled-path", out3, kl_divergence_ref(np.asarray(d3), kl_param, kl_coeff))

    # 4) bf16 input -> tiled path with dtype-aware alignment / native-abs ordering
    B4, H4 = 64, 256
    d4 = jax.random.uniform(k4, (B4, H4), dtype=jnp.float32,
                            minval=0.0, maxval=0.8).astype(jnp.bfloat16)
    out4 = jax.block_until_ready(
        kl_divergence(d4, kl_param, kl_coeff, force_tiled=True, tile_b=16, tile_h=128))
    ref4 = kl_divergence_ref(np.asarray(jnp.asarray(d4, jnp.float32)), kl_param, kl_coeff)
    check("bf16-tiled-path", out4, ref4)

    print("KERNEL_OK")
</pallas_src>

<mosaic_0001>
module attributes {stable_mosaic.version = 11 : i64} {
  func.func @_kl_single_kernel(%arg0: i32, %arg1: memref<16x128xf32, #tpu.memory_space<vmem>>, %arg2: memref<1xf32, #tpu.memory_space<smem>>) attributes {dimension_semantics = [#tpu.dimension_semantics<arbitrary>], iteration_bounds = array<i64: 1>, scalar_prefetch = 0 : i64, scratch_operands = 0 : i64, tpu.core_type = #tpu.core_type<tc>, window_params = [{pipeline_mode = #tpu.pipeline_mode<synchronous>, transform_indices = @transform_0, window_bounds = array<i64: 16, 128>}, {transform_indices = @transform_1, window_bounds = array<i64: 1>}]} {
    %c0 = arith.constant 0 : index
    %c0_0 = arith.constant 0 : index
    %0 = vector.load %arg1[%c0, %c0_0] : memref<16x128xf32, #tpu.memory_space<vmem>>, vector<16x128xf32>
    %1 = math.absf %0 : vector<16x128xf32>
    %cst = arith.constant dense<0.000000e+00> : vector<128xf32>
    %2 = vector.multi_reduction <add>, %1, %cst [0] : vector<16x128xf32> to vector<128xf32>
    %3 = vector.shape_cast %2 : vector<128xf32> to vector<1x128xf32>
    %cst_1 = arith.constant 1.600000e+01 : f32
    %4 = vector.broadcast %cst_1 : f32 to vector<1x128xf32>
    %5 = arith.divf %3, %4 : vector<1x128xf32>
    %cst_2 = arith.constant 5.000000e-02 : f32
    %6 = vector.broadcast %cst_2 : f32 to vector<1x128xf32>
    %7 = arith.divf %6, %5 : vector<1x128xf32>
    %8 = math.absf %7 : vector<1x128xf32>
    %cst_3 = arith.constant 0x7F800000 : f32
    %9 = vector.broadcast %cst_3 : f32 to vector<1x128xf32>
    %10 = arith.cmpf oeq, %8, %9 : vector<1x128xf32>
    %cst_4 = arith.constant 0.000000e+00 : f32
    %11 = vector.broadcast %cst_4 : f32 to vector<1x128xf32>
    %12 = arith.select %10, %11, %7 : vector<1x128xi1>, vector<1x128xf32>
    %cst_5 = arith.constant 1.000000e+00 : f32
    %cst_6 = arith.constant 5.000000e-02 : f32
    %13 = arith.subf %cst_5, %cst_6 : f32
    %cst_7 = arith.constant 1.000000e+00 : f32
    %14 = vector.broadcast %cst_7 : f32 to vector<1x128xf32>
    %15 = arith.subf %14, %5 : vector<1x128xf32>
    %16 = vector.broadcast %13 : f32 to vector<1x128xf32>
    %17 = arith.divf %16, %15 : vector<1x128xf32>
    %18 = math.absf %17 : vector<1x128xf32>
    %cst_8 = arith.constant 0x7F800000 : f32
    %19 = vector.broadcast %cst_8 : f32 to vector<1x128xf32>
    %20 = arith.cmpf oeq, %18, %19 : vector<1x128xf32>
    %cst_9 = arith.constant 0.000000e+00 : f32
    %21 = vector.broadcast %cst_9 : f32 to vector<1x128xf32>
    %22 = arith.select %20, %21, %17 : vector<1x128xi1>, vector<1x128xf32>
    %23 = math.log %12 : vector<1x128xf32>
    %cst_10 = arith.constant 5.000000e-02 : f32
    %24 = vector.broadcast %cst_10 : f32 to vector<1x128xf32>
    %25 = arith.mulf %24, %23 : vector<1x128xf32>
    %cst_11 = arith.constant 1.000000e+00 : f32
    %cst_12 = arith.constant 5.000000e-02 : f32
    %26 = arith.subf %cst_11, %cst_12 : f32
    %27 = math.log %22 : vector<1x128xf32>
    %28 = vector.broadcast %26 : f32 to vector<1x128xf32>
    %29 = arith.mulf %28, %27 : vector<1x128xf32>
    %30 = arith.addf %25, %29 : vector<1x128xf32>
    %31 = math.absf %30 : vector<1x128xf32>
    %cst_13 = arith.constant 0x7F800000 : f32
    %32 = vector.broadcast %cst_13 : f32 to vector<1x128xf32>
    %33 = arith.cmpf oeq, %31, %32 : vector<1x128xf32>
    %cst_14 = arith.constant 0.000000e+00 : f32
    %34 = vector.broadcast %cst_14 : f32 to vector<1x128xf32>
    %35 = arith.select %33, %34, %30 : vector<1x128xi1>, vector<1x128xf32>
    %36 = vector.shape_cast %35 : vector<1x128xf32> to vector<1x1x128xf32>
    %cst_15 = arith.constant dense<0.000000e+00> : vector<1xf32>
    %37 = vector.multi_reduction <add>, %36, %cst_15 [1, 2] : vector<1x1x128xf32> to vector<1xf32>
    %38 = vector.shape_cast %37 : vector<1xf32> to vector<1x1x1xf32>
    %39 = vector.extract %38[0, 0, 0] : f32 from vector<1x1x1xf32>
    %c0_16 = arith.constant 0 : index
    %40 = memref.load %arg2[%c0_16] : memref<1xf32, #tpu.memory_space<smem>>
    memref.store %39, %arg2[%c0_16] : memref<1xf32, #tpu.memory_space<smem>>
    return
  }
  func.func @transform_0(%arg0: i32) -> (i32, i32) {
    %c0_i32 = arith.constant 0 : i32
    %c0_i32_0 = arith.constant 0 : i32
    %c0_i32_1 = arith.constant 0 : i32
    return %c0_i32, %c0_i32_0 : i32, i32
  }
  func.func @transform_1(%arg0: i32) -> i32 {
    %c0_i32 = arith.constant 0 : i32
    %c0_i32_0 = arith.constant 0 : i32
    return %c0_i32 : i32
  }
}

</mosaic_0001>

<llo_original>
// kernel: tpu_custom_call.1
$region0: #{tpu_custom_call.1}
  #allocation0 [shape = 'u32[]', space=smem, size = 0x4, offset = 0x4, fixed_abs, tag = 'smem constant byte address 0x4 - core index']
  #allocation1 [shape = 'u32[144,128]{1,0:T(1,128)}', space=vmem, size = 0x12000, scoped, tag = 'internal scratch']
  %s0 = inlined_call_operand.hbm [shape: f32[16,128], index: 0, kind: input, shape index: {}]
  %s1 = inlined_call_operand.hbm [shape: f32[1], index: 1, kind: output, shape index: {}]
  %s2 = sld [smem:[#allocation0]]
  $region18: #{tpu_custom_call.1} parent=0
    _
  %s4 = ssub.s32 1, %s2
  %s5 = scalar_select 0, %s4, %s2
  $region1: #{tpu_custom_call.1} parent=0
    #allocation2 [shape = 'u8[8192]{0}', space=vmem, size = 0x2000, scoped, tag = 'input window, operand 0, single buffered']
    #allocation3 [shape = 's32[1]{0}', space=sflag, size = 0x4, scoped, tag = 'scoped memory for tpu_custom_call.1']
    #allocation4 [shape = 's32[1]{0}', space=sflag, size = 0x4, scoped, tag = 'scoped memory for tpu_custom_call.1']
    #allocation5 [shape = 'u8[512]{0}', space=smem, size = 0x200, scoped, tag = 'output window, operand 0, single buffered']
    %6 = vsyncpa [#allocation3], 0
    %7 = vsyncpa [#allocation4], 0
    // Predicated region
    $region2: #{tpu_custom_call.1} parent=1 // pred_check
      _
    $region3: #{tpu_custom_call.1} parent=1 // pred_check_branch
      %9 = sbr.rel (0) target = $region5
    $region4: #{tpu_custom_call.1} parent=1 // pred_region
      %s11 = ssub.s32 256, 256
      %12 = vsyncadd [#allocation3], %s11
      %s13 = sshll.u32 [#allocation2], 4
      %s14 = int_to_ptr.vmem [resolvable:$true] %s13
      %19 = dma.hbm_to_vmem [thread:$0]  %s0, 256, %s14, [#allocation3], 128, 128, 8
    $region5: #{tpu_custom_call.1} parent=1 // pred_fallthru
      _
    // Predicated region
    $region6: #{tpu_custom_call.1} parent=1 // pred_check
      _
    $region7: #{tpu_custom_call.1} parent=1 // pred_check_branch
      %21 = sbr.rel (0) target = $region9
    $region8: #{tpu_custom_call.1} parent=1 // pred_region
      %22 = dma.done [#allocation3], 256
    $region9: #{tpu_custom_call.1} parent=1 // pred_fallthru
      _
    %v23 = vld [vmem:[#allocation2] sm:$0xff]
    %v24 = vld [vmem:[#allocation2 + $0x8] sm:$0xff]
    %v25 = vand.u32 2147483647, %v23
    %v26 = vand.u32 2147483647, %v24
    %v27 = vadd.f32 %v25, %v26
    %v28 = vrot.slane %v27, 4
    %v29 = vadd.f32 %v27, %v28
    %v30 = vrot.slane %v29, 2
    %v31 = vadd.f32 %v29, %v30
    %v32 = vrot.slane %v31, 1
    %v33 = vadd.f32 %v31, %v32
    %v34 = vrcp.pop 16.0
    %v35 = vmul.f32 %v33, %v34
    %v36 = vrcp.pop %v35
    %v37 = vmul.f32 0.05, %v36
    %v38 = vand.u32 2147483647, %v37
    %vm39 = vcmp.eq.f32.partialorder %v38, inf
    %v40 = vsel %vm39, 0.0, %v37
    %v41 = vsub.f32 1.0, %v35
    %v42 = vrcp.pop %v41
    %v43 = vmul.f32 0.95, %v42
    %v44 = vand.u32 2147483647, %v43
    %vm45 = vcmp.eq.f32.partialorder %v44, inf
    %v46 = vsel %vm45, 0.0, %v43
    %v47 = vlog2.pop %v40
    %v48 = vmul.f32 %v47, 0.6931472
    %v49 = vmul.f32 %v48, 0.05
    %v50 = vlog2.pop %v46
    %v51 = vmul.f32 %v50, 0.6931472
    %v52 = vmul.f32 %v51, 0.95
    %v53 = vadd.f32 %v49, %v52
    %v54 = vand.u32 2147483647, %v53
    %vm55 = vcmp.eq.f32.partialorder %v54, inf
    %v56 = vsel %vm55, 0.0, %v53
    %vm57 = vcmask 1040384
    %v58 = vsel %vm57, %v56, 0.0
    %59 = vadd.xlane.f32.xlu0 %v58
    %v60 = vpop.xlane.xlu0 %59
    %v61 = vrot.slane %v60, 4
    %v62 = vadd.f32 %v60, %v61
    %v63 = vrot.slane %v62, 2
    %v64 = vadd.f32 %v62, %v63
    %v65 = vrot.slane %v64, 1
    %v66 = vadd.f32 %v64, %v65
    %s67 = vtos %v66
    %s68 = scalar_lea.smem [#allocation5], 0
    %69 = sst [smem:[%s68]] %s67
    // Predicated region
    $region10: #{tpu_custom_call.1} parent=1 // pred_check
      _
    $region11: #{tpu_custom_call.1} parent=1 // pred_check_branch
      %71 = sbr.rel (0) target = $region13
    $region12: #{tpu_custom_call.1} parent=1 // pred_region
      %s73 = ssub.s32 16, 16
      %74 = vsyncadd [#allocation4], %s73
      %77 = dma.smem_to_hbm [#allocation5], 16, %s1, [#allocation4]
    $region13: #{tpu_custom_call.1} parent=1 // pred_fallthru
      _
    // Predicated region
    $region14: #{tpu_custom_call.1} parent=1 // pred_check
      _
    $region15: #{tpu_custom_call.1} parent=1 // pred_check_branch
      %79 = sbr.rel (0) target = $region17
    $region16: #{tpu_custom_call.1} parent=1 // pred_region
      %80 = dma.done [#allocation4], 16
    $region17: #{tpu_custom_call.1} parent=1 // pred_fallthru
      _
    %81 = sfence
    %82 = vsyncpa [#allocation3], 1
    %83 = vsyncpa [#allocation4], 1

</llo_original>
